<compile_context>
chip_gen: v6e
topology: v6e:2x2x1
jax: 0.10.0
libtpu: 0.0.40
codegen_flags: <defaults>
</compile_context>

<pallas_src>
import functools

import jax
import jax.numpy as jnp
import numpy as np
from jax import lax
from jax.experimental import pallas as pl
from jax.experimental.pallas import tpu as pltpu


def _round_up(a, b):
    return (a + b - 1) // b * b


def _sfl_kernel(row_ref, td_ref, neigh_ref, selff_ref, o_ref, *,
                tile_n, sentinel):
    i = pl.program_id(0)            # N-tile (parallel)
    j = pl.program_id(1)            # E-tile (reduction)

    @pl.when(j == 0)
    def _init():
        o_ref[...] = jnp.zeros_like(o_ref)

    t_e = row_ref.shape[1]
    row_t = row_ref[...]            # (1, tE) int32
    td_t = td_ref[...]              # (1, tE) f32

    # td-weighted scatter one-hot:
    #   st[n, e] = td[e]  if row[e] == (global node) i*tile_n + n  else 0
    node_ids = i * tile_n + lax.broadcasted_iota(jnp.int32, (tile_n, t_e), 0)
    st = jnp.where(node_ids == row_t, td_t, jnp.float32(0.0))       # (tN, tE)

    # One MXU matmul accumulates both the td-weighted neighbor sum
    # (columns 0..Cout-1) and the per-node td sum (sentinel column,
    # since neigh[:, sentinel] == 1).  Output block is resident across j.
    o_ref[...] += jnp.dot(st, neigh_ref[...],
                          preferred_element_type=jnp.float32)

    @pl.when(j == pl.num_programs(1) - 1)
    def _finalize():
        acc = o_ref[...]
        tds = acc[:, sentinel:sentinel + 1]                          # (tN, 1)
        inv = 1.0 / jnp.where(tds == 0.0, jnp.float32(1.0), tds)
        o_ref[...] = jnp.maximum(selff_ref[...] + acc * inv, 0.0)


def structural_feature_layer(x, edge_index, time_diffs, W_S, b_S, W_N, b_N,
                             *, tile_n=128, tile_e=256):
    """x: [N, Cin], edge_index: [2, E] int, time_diffs: [E] -> [N, Cout]."""
    N, Cin = x.shape
    Cout = W_S.shape[1]
    E = edge_index.shape[1]

    n_pad = _round_up(N, tile_n)              # tile_n is a multiple of 128
    e_pad = _round_up(E, tile_e)
    cout_pad = _round_up(Cout + 1, 128)       # +1 lane = td-sum sentinel
    sentinel = Cout

    row = edge_index[0].astype(jnp.int32)
    col = edge_index[1].astype(jnp.int32)
    td = time_diffs.astype(jnp.float32)
    xf = x.astype(jnp.float32)

    # --- tiny one-shot XLA precompute (per perf review): narrow projections
    #     and the per-edge gather; the scatter-add stays in the kernel. ---
    self_f = xf @ W_S.astype(jnp.float32) + b_S.astype(jnp.float32)   # [N, Cout]
    self_f_p = jnp.pad(self_f, ((0, n_pad - N), (0, cout_pad - Cout)))

    xw = xf @ W_N.astype(jnp.float32)                                 # [N, Cout]
    neigh = xw[col] + b_N.astype(jnp.float32)                         # [E, Cout]
    neigh_p = jnp.pad(neigh, ((0, e_pad - E), (0, cout_pad - Cout)))
    neigh_p = neigh_p.at[:, sentinel].set(1.0)   # sentinel column == 1 everywhere

    # Padded edges get td = 0 -> contribute nothing to either reduction.
    row_p = jnp.pad(row, (0, e_pad - E)).reshape(1, e_pad)
    td_p = jnp.pad(td, (0, e_pad - E)).reshape(1, e_pad)

    grid = (n_pad // tile_n, e_pad // tile_e)

    grid_spec = pltpu.PrefetchScalarGridSpec(
        num_scalar_prefetch=0,
        grid=grid,
        in_specs=[
            pl.BlockSpec((1, tile_e), lambda i, j: (0, j)),            # row idx
            pl.BlockSpec((1, tile_e), lambda i, j: (0, j)),            # td
            pl.BlockSpec((tile_e, cout_pad), lambda i, j: (j, 0)),     # neigh
            pl.BlockSpec((tile_n, cout_pad), lambda i, j: (i, 0)),     # self_f
        ],
        out_specs=pl.BlockSpec((tile_n, cout_pad), lambda i, j: (i, 0)),
    )

    out = pl.pallas_call(
        functools.partial(_sfl_kernel, tile_n=tile_n, sentinel=sentinel),
        grid_spec=grid_spec,
        out_shape=jax.ShapeDtypeStruct((n_pad, cout_pad), jnp.float32),
        compiler_params=pltpu.CompilerParams(
            dimension_semantics=("parallel", "arbitrary")),
    )(row_p, td_p, neigh_p, self_f_p)

    return out[:N, :Cout]


def _reference(x, edge_index, time_diffs, W_S, b_S, W_N, b_N):
    """Pure-JAX reference mirroring the PyTorch forward."""
    N = x.shape[0]
    row, col = edge_index[0], edge_index[1]
    self_f = x @ W_S + b_S
    neigh = x[col] @ W_N + b_N
    td = time_diffs.astype(jnp.float32)
    tds = jnp.zeros((N,), jnp.float32).at[row].add(td)
    tds = jnp.where(tds == 0.0, 1.0, tds)
    rel = td / tds[row]
    weighted = neigh * rel[:, None]
    agg = jnp.zeros((N, W_N.shape[1]), jnp.float32).at[row].add(weighted)
    return jax.nn.relu(self_f + agg)


if __name__ == "__main__":
    N, E = 256, 512          # 2 N-tiles x 2 E-tiles at default tile sizes
    Cin, Cout = 8, 16        # in_channels, out_channels

    key = jax.random.PRNGKey(0)
    kx, kr, kc, kt, kws, kbs, kwn, kbn = jax.random.split(key, 8)

    x = jax.random.normal(kx, (N, Cin), dtype=jnp.float32)
    row = jax.random.randint(kr, (E,), 0, N, dtype=jnp.int32)
    col = jax.random.randint(kc, (E,), 0, N, dtype=jnp.int32)
    edge_index = jnp.stack([row, col], axis=0)
    time_diffs = jax.random.uniform(kt, (E,), jnp.float32, 0.0, 5.0)

    # deterministic nn.Linear-style init: U(-1/sqrt(Cin), 1/sqrt(Cin))
    bound = 1.0 / np.sqrt(Cin)
    W_S = jax.random.uniform(kws, (Cin, Cout), jnp.float32, -bound, bound)
    b_S = jax.random.uniform(kbs, (Cout,), jnp.float32, -bound, bound)
    W_N = jax.random.uniform(kwn, (Cin, Cout), jnp.float32, -bound, bound)
    b_N = jax.random.uniform(kbn, (Cout,), jnp.float32, -bound, bound)

    out = structural_feature_layer(x, edge_index, time_diffs, W_S, b_S, W_N, b_N)
    out = jax.block_until_ready(out)

    ref = _reference(x, edge_index, time_diffs, W_S, b_S, W_N, b_N)
    np.testing.assert_allclose(np.asarray(out), np.asarray(ref),
                               rtol=2e-4, atol=1e-5)

    print("KERNEL_OK")
</pallas_src>

<mosaic_0001>
module attributes {stable_mosaic.version = 11 : i64} {
  func.func @_sfl_kernel(%arg0: i32, %arg1: i32, %arg2: memref<1x256xi32, #tpu.memory_space<vmem>>, %arg3: memref<1x256xf32, #tpu.memory_space<vmem>>, %arg4: memref<256x128xf32, #tpu.memory_space<vmem>>, %arg5: memref<128x128xf32, #tpu.memory_space<vmem>>, %arg6: memref<128x128xf32, #tpu.memory_space<vmem>>) attributes {dimension_semantics = [#tpu.dimension_semantics<parallel>, #tpu.dimension_semantics<arbitrary>], iteration_bounds = array<i64: 2, 2>, scalar_prefetch = 0 : i64, scratch_operands = 0 : i64, tpu.core_type = #tpu.core_type<tc>, window_params = [{transform_indices = @transform_0, window_bounds = array<i64: 1, 256>}, {transform_indices = @transform_1, window_bounds = array<i64: 1, 256>}, {transform_indices = @transform_2, window_bounds = array<i64: 256, 128>}, {transform_indices = @transform_3, window_bounds = array<i64: 128, 128>}, {transform_indices = @transform_4, window_bounds = array<i64: 128, 128>}]} {
    %c0_i32 = arith.constant 0 : i32
    %0 = arith.cmpi eq, %arg1, %c0_i32 : i32
    %1 = arith.extui %0 : i1 to i32
    %c0_i32_0 = arith.constant 0 : i32
    %2 = arith.cmpi ne, %1, %c0_i32_0 : i32
    scf.if %2 {
      %cst_12 = arith.constant 0.000000e+00 : f32
      %23 = vector.broadcast %cst_12 : f32 to vector<128x128xf32>
      %c0_13 = arith.constant 0 : index
      %c0_14 = arith.constant 0 : index
      %24 = vector.load %arg6[%c0_13, %c0_14] : memref<128x128xf32, #tpu.memory_space<vmem>>, vector<128x128xf32>
      tpu.vector_store %arg6[%c0_13, %c0_14], %23 {strides = array<i32>} : memref<128x128xf32, #tpu.memory_space<vmem>>, vector<128x128xf32>,
    } else {
    }
    %c0 = arith.constant 0 : index
    %c0_1 = arith.constant 0 : index
    %3 = vector.load %arg2[%c0, %c0_1] : memref<1x256xi32, #tpu.memory_space<vmem>>, vector<1x256xi32>
    %c0_2 = arith.constant 0 : index
    %c0_3 = arith.constant 0 : index
    %4 = vector.load %arg3[%c0_2, %c0_3] : memref<1x256xf32, #tpu.memory_space<vmem>>, vector<1x256xf32>
    %c128_i32 = arith.constant 128 : i32
    %5 = arith.muli %arg0, %c128_i32 : i32
    %6 = tpu.iota {dimensions = array<i32: 0>} : vector<128x256xi32>
    %7 = vector.broadcast %5 : i32 to vector<128x256xi32>
    %8 = arith.addi %7, %6 : vector<128x256xi32>
    %9 = vector.broadcast %3 : vector<1x256xi32> to vector<128x256xi32>
    %10 = arith.cmpi eq, %8, %9 : vector<128x256xi32>
    %cst = arith.constant 0.000000e+00 : f32
    %11 = vector.shape_cast %4 : vector<1x256xf32> to vector<1x256xf32>
    %12 = vector.broadcast %11 : vector<1x256xf32> to vector<128x256xf32>
    %13 = vector.broadcast %cst : f32 to vector<128x256xf32>
    %14 = arith.select %10, %12, %13 : vector<128x256xi1>, vector<128x256xf32>
    %c0_4 = arith.constant 0 : index
    %c0_5 = arith.constant 0 : index
    %15 = vector.load %arg6[%c0_4, %c0_5] : memref<128x128xf32, #tpu.memory_space<vmem>>, vector<128x128xf32>
    %c0_6 = arith.constant 0 : index
    %c0_7 = arith.constant 0 : index
    %16 = vector.load %arg4[%c0_6, %c0_7] : memref<256x128xf32, #tpu.memory_space<vmem>>, vector<256x128xf32>
    %cst_8 = arith.constant dense<0.000000e+00> : vector<128x128xf32>
    %17 = tpu.matmul %14, %16, %cst_8 {dimension_numbers = #tpu.dot_dimension_numbers<[1], [0], [0], [1], [0, 0, 1, 1], [], []>} : vector<128x256xf32>, vector<256x128xf32>, vector<128x128xf32> -> vector<128x128xf32>
    %18 = arith.addf %15, %17 : vector<128x128xf32>
    %c0_9 = arith.constant 0 : index
    %c0_10 = arith.constant 0 : index
    %19 = vector.load %arg6[%c0_9, %c0_10] : memref<128x128xf32, #tpu.memory_space<vmem>>, vector<128x128xf32>
    tpu.vector_store %arg6[%c0_9, %c0_10], %18 {strides = array<i32>} : memref<128x128xf32, #tpu.memory_space<vmem>>, vector<128x128xf32>,
    %c1_i32 = arith.constant 1 : i32
    %20 = arith.cmpi eq, %arg1, %c1_i32 : i32
    %21 = arith.extui %20 : i1 to i32
    %c0_i32_11 = arith.constant 0 : i32
    %22 = arith.cmpi ne, %21, %c0_i32_11 : i32
    scf.if %22 {
      %c0_12 = arith.constant 0 : index
      %c0_13 = arith.constant 0 : index
      %23 = vector.load %arg6[%c0_12, %c0_13] : memref<128x128xf32, #tpu.memory_space<vmem>>, vector<128x128xf32>
      %24 = vector.extract_strided_slice %23 {offsets = [0, 16], sizes = [128, 1], strides = [1, 1]} : vector<128x128xf32> to vector<128x1xf32>
      %cst_14 = arith.constant 0.000000e+00 : f32
      %25 = vector.broadcast %cst_14 : f32 to vector<128x1xf32>
      %26 = arith.cmpf oeq, %24, %25 : vector<128x1xf32>
      %cst_15 = arith.constant 1.000000e+00 : f32
      %27 = vector.broadcast %cst_15 : f32 to vector<128x1xf32>
      %28 = arith.select %26, %27, %24 : vector<128x1xi1>, vector<128x1xf32>
      %cst_16 = arith.constant 1.000000e+00 : f32
      %29 = vector.broadcast %cst_16 : f32 to vector<128x1xf32>
      %30 = arith.divf %29, %28 : vector<128x1xf32>
      %c0_17 = arith.constant 0 : index
      %c0_18 = arith.constant 0 : index
      %31 = vector.load %arg5[%c0_17, %c0_18] : memref<128x128xf32, #tpu.memory_space<vmem>>, vector<128x128xf32>
      %32 = vector.broadcast %30 : vector<128x1xf32> to vector<128x128xf32>
      %33 = arith.mulf %23, %32 : vector<128x128xf32>
      %34 = arith.addf %31, %33 : vector<128x128xf32>
      %cst_19 = arith.constant 0.000000e+00 : f32
      %35 = vector.broadcast %cst_19 : f32 to vector<128x128xf32>
      %36 = arith.maximumf %34, %35 : vector<128x128xf32>
      %c0_20 = arith.constant 0 : index
      %c0_21 = arith.constant 0 : index
      %37 = vector.load %arg6[%c0_20, %c0_21] : memref<128x128xf32, #tpu.memory_space<vmem>>, vector<128x128xf32>
      tpu.vector_store %arg6[%c0_20, %c0_21], %36 {strides = array<i32>} : memref<128x128xf32, #tpu.memory_space<vmem>>, vector<128x128xf32>,
    } else {
    }
    return
  }
  func.func @transform_0(%arg0: i32, %arg1: i32) -> (i32, i32) {
    %c0_i32 = arith.constant 0 : i32
    %c0_i32_0 = arith.constant 0 : i32
    return %c0_i32, %arg1 : i32, i32
  }
  func.func @transform_1(%arg0: i32, %arg1: i32) -> (i32, i32) {
    %c0_i32 = arith.constant 0 : i32
    %c0_i32_0 = arith.constant 0 : i32
    return %c0_i32, %arg1 : i32, i32
  }
  func.func @transform_2(%arg0: i32, %arg1: i32) -> (i32, i32) {
    %c0_i32 = arith.constant 0 : i32
    %c0_i32_0 = arith.constant 0 : i32
    return %arg1, %c0_i32 : i32, i32
  }
  func.func @transform_3(%arg0: i32, %arg1: i32) -> (i32, i32) {
    %c0_i32 = arith.constant 0 : i32
    %c0_i32_0 = arith.constant 0 : i32
    return %arg0, %c0_i32 : i32, i32
  }
  func.func @transform_4(%arg0: i32, %arg1: i32) -> (i32, i32) {
    %c0_i32 = arith.constant 0 : i32
    %c0_i32_0 = arith.constant 0 : i32
    return %arg0, %c0_i32 : i32, i32
  }
}

</mosaic_0001>

<llo_original>
// kernel: tpu_custom_call.1
$region0: #{tpu_custom_call.1}
  #allocation0 [shape = 'u32[]', space=smem, size = 0x4, offset = 0x4, fixed_abs, tag = 'smem constant byte address 0x4 - core index']
  #allocation1 [shape = 'u32[144,128]{1,0:T(1,128)}', space=vmem, size = 0x12000, scoped, tag = 'internal scratch']
  %s0 = inlined_call_operand.hbm [shape: s32[1,512], index: 0, kind: input, shape index: {}]
  %s1 = inlined_call_operand.hbm [shape: f32[1,512], index: 1, kind: input, shape index: {}]
  %s2 = inlined_call_operand.hbm [shape: f32[512,128], index: 2, kind: input, shape index: {}]
  %s3 = inlined_call_operand.hbm [shape: f32[256,128], index: 3, kind: input, shape index: {}]
  %s4 = inlined_call_operand.hbm [shape: f32[256,128], index: 4, kind: output, shape index: {}]
  %s5 = sld [smem:[#allocation0]]
  $region73: #{tpu_custom_call.1} parent=0
    _
  %s7 = ssub.s32 1, %s5
  %s8 = scalar_select 0, %s7, %s5
  $region1: #{tpu_custom_call.1} parent=0
    #allocation2 [shape = 'u8[2048]{0}', space=vmem, size = 0x800, scoped, tag = 'input window, operand 0']
    #allocation3 [shape = 's32[2]{0}', space=sflag, size = 0x8, scoped, tag = 'scoped memory for tpu_custom_call.1']
    #allocation4 [shape = 's32[2]{0}', space=sflag, size = 0x8, scoped, tag = 'scoped memory for tpu_custom_call.1']
    #allocation5 [shape = 'u8[2048]{0}', space=vmem, size = 0x800, scoped, tag = 'input window, operand 1']
    #allocation6 [shape = 's32[2]{0}', space=sflag, size = 0x8, scoped, tag = 'scoped memory for tpu_custom_call.1']
    #allocation7 [shape = 'u8[262144]{0}', space=vmem, size = 0x40000, scoped, tag = 'input window, operand 2']
    #allocation8 [shape = 'u8[131072]{0}', space=vmem, size = 0x20000, scoped, tag = 'input window, operand 3']
    #allocation9 [shape = 's32[2]{0}', space=sflag, size = 0x8, scoped, tag = 'scoped memory for tpu_custom_call.1']
    #allocation10 [shape = 'u8[131072]{0}', space=vmem, size = 0x20000, scoped, tag = 'output window, operand 0']
    %9 = vsyncpa [#allocation3], 0
    %s10 = scalar_lea.sflag [#allocation3], 1
    %11 = vsyncpa %s10, 0
    %12 = vsyncpa [#allocation6], 0
    %s13 = scalar_lea.sflag [#allocation6], 1
    %14 = vsyncpa %s13, 0
    %15 = vsyncpa [#allocation9], 0
    %s16 = scalar_lea.sflag [#allocation9], 1
    %17 = vsyncpa %s16, 0
    %18 = vsyncpa [#allocation4], 0
    %s19 = scalar_lea.sflag [#allocation4], 1
    %20 = vsyncpa %s19, 0
    loop: start=0, step=1, limit=6
    $region2: #{tpu_custom_call.1} parent=1 // loop_pre_header
      _
    $region3: #{tpu_custom_call.1} parent=1 // loop_header
      %s22 = sphi 0, %s26
      %p23 = scmp.ge.s32.totalorder %s22, 6
      %s29 = sphi 0, %s41
      %s30 = sphi 0, %s37
      %s31 = sphi 0, %s29
      %s32 = sphi 0, %s30
      %s33 = sphi 0, %s31
      %s34 = sphi 0, %s32
      %s44 = sphi 0, %s46
      %s47 = sphi 0, %s44
      %s48 = sphi 0, %s47
      %s64 = sphi 0, %s48
      %s70 = sphi 0, %s72
      %s73 = sphi 0, %s70
      %s74 = sphi 0, %s73
      %s90 = sphi 0, %s74
      %s96 = sphi 0, %s98
      %s99 = sphi 0, %s96
      %s100 = sphi 0, %s99
      %s116 = sphi 0, %s100
      %s122 = sphi 0, %s124
      %s125 = sphi 0, %s122
      %s126 = sphi 0, %s125
      %s142 = sphi 0, %s126
      %s148 = sphi 0, %s150
      %s151 = sphi 0, %s148
      %s152 = sphi 0, %s151
      %s168 = sphi 0, %s152
    $region4: #{tpu_custom_call.1} parent=1 // loop_header_branch
      %25 = sbr.rel (%p23) target = $region8
    $region5: #{tpu_custom_call.1} parent=1 // loop_body
      %s27 = ssub.s32 %s22, 1
      %s28 = ssub.s32 %s22, 2
      %s35 = sadd.s32 1, %s30
      %p36 = scmp.ge.s32.totalorder %s35, 2
      %s37 = scalar_select %p36, 0, %s35
      %s38 = sadd.s32 1, %s29
      %s39 = scalar_select %p36, %s38, %s29
      %p40 = scmp.ge.s32.totalorder %s39, 2
      %s41 = scalar_select %p40, 0, %s39
      %s42 = ssub.s32 %s30, %s37
      %p43 = scmp.eq.s32.totalorder %s42, 0
      %s45 = sadd.s32 %s44, 1
      %s46 = scalar_select %p43, %s44, %s45
      %p49 = pneg %p43
      %p50 = scmp.eq.s32.totalorder %s22, 3
      %p51 = por %p49, %p50
      %p52 = scmp.ne.s32.totalorder %s44, %s47
      %p53 = scmp.eq.s32.totalorder %s22, 0
      %p54 = por %p52, %p53
      %p55 = scmp.ne.s32.totalorder %s44, %s47
      %p56 = scmp.eq.s32.totalorder %s27, 3
      %p57 = por %p55, %p56
      %p58 = scmp.ne.s32.totalorder %s47, %s48
      %p59 = scmp.eq.s32.totalorder %s27, 0
      %p60 = por %p58, %p59
      %p61 = scmp.ne.s32.totalorder %s47, %s48
      %p62 = scmp.eq.s32.totalorder %s28, 3
      %p63 = por %p61, %p62
      %p65 = scmp.ne.s32.totalorder %s48, %s64
      %p66 = scmp.eq.s32.totalorder %s28, 0
      %p67 = por %p65, %p66
      %s68 = ssub.s32 %s30, %s37
      %p69 = scmp.eq.s32.totalorder %s68, 0
      %s71 = sadd.s32 %s70, 1
      %s72 = scalar_select %p69, %s70, %s71
      %p75 = pneg %p69
      %p76 = scmp.eq.s32.totalorder %s22, 3
      %p77 = por %p75, %p76
      %p78 = scmp.ne.s32.totalorder %s70, %s73
      %p79 = scmp.eq.s32.totalorder %s22, 0
      %p80 = por %p78, %p79
      %p81 = scmp.ne.s32.totalorder %s70, %s73
      %p82 = scmp.eq.s32.totalorder %s27, 3
      %p83 = por %p81, %p82
      %p84 = scmp.ne.s32.totalorder %s73, %s74
      %p85 = scmp.eq.s32.totalorder %s27, 0
      %p86 = por %p84, %p85
      %p87 = scmp.ne.s32.totalorder %s73, %s74
      %p88 = scmp.eq.s32.totalorder %s28, 3
      %p89 = por %p87, %p88
      %p91 = scmp.ne.s32.totalorder %s74, %s90
      %p92 = scmp.eq.s32.totalorder %s28, 0
      %p93 = por %p91, %p92
      %s94 = ssub.s32 %s30, %s37
      %p95 = scmp.eq.s32.totalorder %s94, 0
      %s97 = sadd.s32 %s96, 1
      %s98 = scalar_select %p95, %s96, %s97
      %p101 = pneg %p95
      %p102 = scmp.eq.s32.totalorder %s22, 3
      %p103 = por %p101, %p102
      %p104 = scmp.ne.s32.totalorder %s96, %s99
      %p105 = scmp.eq.s32.totalorder %s22, 0
      %p106 = por %p104, %p105
      %p107 = scmp.ne.s32.totalorder %s96, %s99
      %p108 = scmp.eq.s32.totalorder %s27, 3
      %p109 = por %p107, %p108
      %p110 = scmp.ne.s32.totalorder %s99, %s100
      %p111 = scmp.eq.s32.totalorder %s27, 0
      %p112 = por %p110, %p111
      %p113 = scmp.ne.s32.totalorder %s99, %s100
      %p114 = scmp.eq.s32.totalorder %s28, 3
      %p115 = por %p113, %p114
      %p117 = scmp.ne.s32.totalorder %s100, %s116
      %p118 = scmp.eq.s32.totalorder %s28, 0
      %p119 = por %p117, %p118
      %s120 = ssub.s32 %s29, %s41
      %p121 = scmp.eq.s32.totalorder %s120, 0
      %s123 = sadd.s32 %s122, 1
      %s124 = scalar_select %p121, %s122, %s123
      %p127 = pneg %p121
      %p128 = scmp.eq.s32.totalorder %s22, 3
      %p129 = por %p127, %p128
      %p130 = scmp.ne.s32.totalorder %s122, %s125
      %p131 = scmp.eq.s32.totalorder %s22, 0
      %p132 = por %p130, %p131
      %p133 = scmp.ne.s32.totalorder %s122, %s125
      %p134 = scmp.eq.s32.totalorder %s27, 3
      %p135 = por %p133, %p134
      %p136 = scmp.ne.s32.totalorder %s125, %s126
      %p137 = scmp.eq.s32.totalorder %s27, 0
      %p138 = por %p136, %p137
      %p139 = scmp.ne.s32.totalorder %s125, %s126
      %p140 = scmp.eq.s32.totalorder %s28, 3
      %p141 = por %p139, %p140
      %p143 = scmp.ne.s32.totalorder %s126, %s142
      %p144 = scmp.eq.s32.totalorder %s28, 0
      %p145 = por %p143, %p144
      %s146 = ssub.s32 %s29, %s41
      %p147 = scmp.eq.s32.totalorder %s146, 0
      %s149 = sadd.s32 %s148, 1
      %s150 = scalar_select %p147, %s148, %s149
      %p153 = pneg %p147
      %p154 = scmp.eq.s32.totalorder %s22, 3
      %p155 = por %p153, %p154
      %p156 = scmp.ne.s32.totalorder %s148, %s151
      %p157 = scmp.eq.s32.totalorder %s22, 0
      %p158 = por %p156, %p157
      %p159 = scmp.ne.s32.totalorder %s148, %s151
      %p160 = scmp.eq.s32.totalorder %s27, 3
      %p161 = por %p159, %p160
      %p162 = scmp.ne.s32.totalorder %s151, %s152
      %p163 = scmp.eq.s32.totalorder %s27, 0
      %p164 = por %p162, %p163
      %p165 = scmp.ne.s32.totalorder %s151, %s152
      %p166 = scmp.eq.s32.totalorder %s28, 3
      %p167 = por %p165, %p166
      %p169 = scmp.ne.s32.totalorder %s152, %s168
      %p170 = scmp.eq.s32.totalorder %s28, 0
      %p171 = por %p169, %p170
      %p172 = scmp.le.s32.totalorder 1, %s22
      %p173 = scmp.lt.s32.totalorder %s22, 5
      %p174 = pnand %p172, %p173
      %p175 = pneg %p174
      // Predicated region
      $region9: #{tpu_custom_call.1} parent=5 // pred_check
        _
      $region10: #{tpu_custom_call.1} parent=5 // pred_check_branch
        %177 = sbr.rel (%p174) target = $region12
      $region11: #{tpu_custom_call.1} parent=5 // pred_region
        %s178 = ssub.s32 %s22, 1
      $region12: #{tpu_custom_call.1} parent=5 // pred_fallthru
        _
      %p179 = scmp.lt.s32.totalorder %s22, 4
      // Predicated region
      $region13: #{tpu_custom_call.1} parent=5 // pred_check
        %p180 = pneg %p179
      $region14: #{tpu_custom_call.1} parent=5 // pred_check_branch
        %182 = sbr.rel (%p180) target = $region16
      $region15: #{tpu_custom_call.1} parent=5 // pred_region
        // Predicated region
        $region17: #{tpu_custom_call.1} parent=15 // pred_check
          %p183 = pneg %p54
        $region18: #{tpu_custom_call.1} parent=15 // pred_check_branch
          %185 = sbr.rel (%p183) target = $region20
        $region19: #{tpu_custom_call.1} parent=15 // pred_region
          %s186 = sand.u32 %s44, 1
          %s187 = scalar_lea.sflag [#allocation3], %s186
          %s188 = sand.u32 %s44, 1
          %s189 = smul.addr %s188, 2
          %s190 = scalar_lea.vmem [#allocation2], %s189
          %s191 = smul.u32 2, %s30
          %s193 = ssub.s32 32, 32
          %194 = vsyncadd %s187, %s193
          %s195 = smul.addr %s191, 16
          %s196 = scalar_lea.hbm %s0, %s195
          %s198 = sshll.u32 %s190, 4
          %s199 = int_to_ptr.vmem [resolvable:$true] %s198
          %201 = dma.hbm_to_vmem [thread:$0]  %s196, 32, %s199, %s187
        $region20: #{tpu_custom_call.1} parent=15 // pred_fallthru
          _
        // Predicated region
        $region21: #{tpu_custom_call.1} parent=15 // pred_check
          %p202 = pneg %p80
        $region22: #{tpu_custom_call.1} parent=15 // pred_check_branch
          %204 = sbr.rel (%p202) target = $region24
        $region23: #{tpu_custom_call.1} parent=15 // pred_region
          %s205 = sand.u32 %s22, 1
          %s206 = scalar_lea.sflag [#allocation6], %s205
          %s207 = sand.u32 %s70, 1
          %s208 = smul.addr %s207, 2
          %s209 = scalar_lea.vmem [#allocation5], %s208
          %s210 = smul.u32 2, %s30
          %s212 = ssub.s32 32, 32
          %213 = vsyncadd %s206, %s212
          %s214 = smul.addr %s210, 16
          %s215 = scalar_lea.hbm %s1, %s214
          %s217 = sshll.u32 %s209, 4
          %s218 = int_to_ptr.vmem [resolvable:$true] %s217
          %220 = dma.hbm_to_vmem [thread:$0]  %s215, 32, %s218, %s206
        $region24: #{tpu_custom_call.1} parent=15 // pred_fallthru
          _
        // Predicated region
        $region25: #{tpu_custom_call.1} parent=15 // pred_check
          %p221 = pneg %p106
        $region26: #{tpu_custom_call.1} parent=15 // pred_check_branch
          %223 = sbr.rel (%p221) target = $region28
        $region27: #{tpu_custom_call.1} parent=15 // pred_region
          %s224 = sand.u32 %s22, 1
          %s225 = scalar_lea.sflag [#allocation6], %s224
          %s226 = sand.u32 %s96, 1
          %s227 = smul.addr %s226, 256
          %s228 = scalar_lea.vmem [#allocation7], %s227
          %s229 = smul.u32 32, %s30
          %s231 = ssub.s32 4096, 4096
          %232 = vsyncadd %s225, %s231
          %s233 = smul.addr %s229, 128
          %s234 = scalar_lea.hbm %s2, %s233
          %s235 = sshll.u32 %s228, 4
          %s236 = int_to_ptr.vmem [resolvable:$true] %s235
          %241 = dma.hbm_to_vmem [thread:$0]  %s234, 4096, %s236, %s225, 128, 128, 8
        $region28: #{tpu_custom_call.1} parent=15 // pred_fallthru
          _
        // Predicated region
        $region29: #{tpu_custom_call.1} parent=15 // pred_check
          %p242 = pneg %p132
        $region30: #{tpu_custom_call.1} parent=15 // pred_check_branch
          %244 = sbr.rel (%p242) target = $region32
        $region31: #{tpu_custom_call.1} parent=15 // pred_region
          %s245 = sand.u32 %s122, 1
          %s246 = scalar_lea.sflag [#allocation9], %s245
          %s247 = sand.u32 %s122, 1
          %s248 = smul.addr %s247, 128
          %s249 = scalar_lea.vmem [#allocation8], %s248
          %s250 = smul.u32 16, %s29
          %s252 = ssub.s32 2048, 2048
          %253 = vsyncadd %s246, %s252
          %s254 = smul.addr %s250, 128
          %s255 = scalar_lea.hbm %s3, %s254
          %s256 = sshll.u32 %s249, 4
          %s257 = int_to_ptr.vmem [resolvable:$true] %s256
          %262 = dma.hbm_to_vmem [thread:$0]  %s255, 2048, %s257, %s246, 128, 128, 8
        $region32: #{tpu_custom_call.1} parent=15 // pred_fallthru
          _
      $region16: #{tpu_custom_call.1} parent=5 // pred_fallthru
        _
      %p263 = scmp.le.s32.totalorder 1, %s22
      %p264 = scmp.lt.s32.totalorder %s22, 5
      %p265 = pnand %p263, %p264
      %p266 = pneg %p265
      // Predicated region
      $region33: #{tpu_custom_call.1} parent=5 // pred_check
        _
      $region34: #{tpu_custom_call.1} parent=5 // pred_check_branch
        %268 = sbr.rel (%p265) target = $region36
      $region35: #{tpu_custom_call.1} parent=5 // pred_region
        %s269 = ssub.s32 %s22, 1
        %s270 = sand.u32 %s47, 1
        %s271 = scalar_lea.sflag [#allocation3], %s270
        %s272 = sand.u32 %s47, 1
        %s273 = smul.addr %s272, 2
        %s274 = scalar_lea.vmem [#allocation2], %s273
        // Predicated region
        $region37: #{tpu_custom_call.1} parent=35 // pred_check
          %p275 = pneg %p60
        $region38: #{tpu_custom_call.1} parent=35 // pred_check_branch
          %277 = sbr.rel (%p275) target = $region40
        $region39: #{tpu_custom_call.1} parent=35 // pred_region
          %278 = dma.done %s271, 32
        $region40: #{tpu_custom_call.1} parent=35 // pred_fallthru
          _
        %s279 = sand.u32 %s27, 1
        %s280 = scalar_lea.sflag [#allocation6], %s279
        %s281 = sand.u32 %s73, 1
        %s282 = smul.addr %s281, 2
        %s283 = scalar_lea.vmem [#allocation5], %s282
        // Predicated region
        $region41: #{tpu_custom_call.1} parent=35 // pred_check
          %p284 = pneg %p86
        $region42: #{tpu_custom_call.1} parent=35 // pred_check_branch
          %286 = sbr.rel (%p284) target = $region44
        $region43: #{tpu_custom_call.1} parent=35 // pred_region
          %287 = dma.done %s280, 32
        $region44: #{tpu_custom_call.1} parent=35 // pred_fallthru
          _
        %s288 = sand.u32 %s27, 1
        %s289 = scalar_lea.sflag [#allocation6], %s288
        %s290 = sand.u32 %s99, 1
        %s291 = smul.addr %s290, 256
        %s292 = scalar_lea.vmem [#allocation7], %s291
        // Predicated region
        $region45: #{tpu_custom_call.1} parent=35 // pred_check
          %p293 = pneg %p112
        $region46: #{tpu_custom_call.1} parent=35 // pred_check_branch
          %295 = sbr.rel (%p293) target = $region48
        $region47: #{tpu_custom_call.1} parent=35 // pred_region
          %296 = dma.done %s289, 4096
        $region48: #{tpu_custom_call.1} parent=35 // pred_fallthru
          _
        %s297 = sand.u32 %s125, 1
        %s298 = scalar_lea.sflag [#allocation9], %s297
        %s299 = sand.u32 %s125, 1
        %s300 = smul.addr %s299, 128
        %s301 = scalar_lea.vmem [#allocation8], %s300
        // Predicated region
        $region49: #{tpu_custom_call.1} parent=35 // pred_check
          %p302 = pneg %p138
        $region50: #{tpu_custom_call.1} parent=35 // pred_check_branch
          %304 = sbr.rel (%p302) target = $region52
        $region51: #{tpu_custom_call.1} parent=35 // pred_region
          %305 = dma.done %s298, 2048
        $region52: #{tpu_custom_call.1} parent=35 // pred_fallthru
          _
        %s306 = sand.u32 %s47, 1
        %s307 = scalar_lea.sflag [#allocation3], %s306
        %s308 = sand.u32 %s47, 1
        %s309 = smul.addr %s308, 2
        %s310 = scalar_lea.vmem [#allocation2], %s309
        %p311 = pneg %p60
        %p312 = pneg %p57
        %s313 = sand.u32 %s27, 1
        %s314 = scalar_lea.sflag [#allocation6], %s313
        %s315 = sand.u32 %s73, 1
        %s316 = smul.addr %s315, 2
        %s317 = scalar_lea.vmem [#allocation5], %s316
        %p318 = pneg %p86
        %p319 = pneg %p83
        %s320 = sand.u32 %s27, 1
        %s321 = scalar_lea.sflag [#allocation6], %s320
        %s322 = sand.u32 %s99, 1
        %s323 = smul.addr %s322, 256
        %s324 = scalar_lea.vmem [#allocation7], %s323
        %p325 = pneg %p112
        %p326 = pneg %p109
        %s327 = sand.u32 %s125, 1
        %s328 = scalar_lea.sflag [#allocation9], %s327
        %s329 = sand.u32 %s125, 1
        %s330 = smul.addr %s329, 128
        %s331 = scalar_lea.vmem [#allocation8], %s330
        %p332 = pneg %p138
        %p333 = pneg %p135
        %p334 = pneg %p164
        %p335 = pneg %p161
        %s336 = sand.u32 %s151, 1
        %s337 = scalar_lea.sflag [#allocation4], %s336
        %s338 = sand.u32 %s151, 1
        %s339 = smul.addr %s338, 128
        %s340 = scalar_lea.vmem [#allocation10], %s339
        %s341 = smul.u32 2, %s32
        %s342 = smul.u32 2, %s32
        %s343 = smul.u32 32, %s32
        %s344 = smul.u32 16, %s31
        %s345 = smul.u32 16, %s31
        %p346 = scmp.eq.s32.totalorder %s32, 0
        // Predicated region
        $region53: #{tpu_custom_call.1} parent=35 // pred_check
          %p347 = pneg %p346
        $region54: #{tpu_custom_call.1} parent=35 // pred_check_branch
          %349 = sbr.rel (%p347) target = $region56
        $region55: #{tpu_custom_call.1} parent=35 // pred_region
          %350 = vst [vmem:[%s340] sm:$0xff] 0.0
          %351 = vst [vmem:[%s340 + $0x8] sm:$0xff] 0.0
          %352 = vst [vmem:[%s340 + $0x10] sm:$0xff] 0.0
          %353 = vst [vmem:[%s340 + $0x18] sm:$0xff] 0.0
          %354 = vst [vmem:[%s340 + $0x20] sm:$0xff] 0.0
          %355 = vst [vmem:[%s340 + $0x28] sm:$0xff] 0.0
          %356 = vst [vmem:[%s340 + $0x30] sm:$0xff] 0.0
          %357 = vst [vmem:[%s340 + $0x38] sm:$0xff] 0.0
          %358 = vst [vmem:[%s340 + $0x40] sm:$0xff] 0.0
          %359 = vst [vmem:[%s340 + $0x48] sm:$0xff] 0.0
          %360 = vst [vmem:[%s340 + $0x50] sm:$0xff] 0.0
          %361 = vst [vmem:[%s340 + $0x58] sm:$0xff] 0.0
          %362 = vst [vmem:[%s340 + $0x60] sm:$0xff] 0.0
          %363 = vst [vmem:[%s340 + $0x68] sm:$0xff] 0.0
          %364 = vst [vmem:[%s340 + $0x70] sm:$0xff] 0.0
          %365 = vst [vmem:[%s340 + $0x78] sm:$0xff] 0.0
        $region56: #{tpu_custom_call.1} parent=35 // pred_fallthru
          _
        %v366 = vld [vmem:[%s274] sm:$0x3]
        %v367 = vld [vmem:[%s283] sm:$0x3]
        %s368 = smul.u32 %s31, 128
        %v369 = vlaneseq
        %v370 = vshrl.u32 %v369, 7
        %v371 = vadd.s32 %v370, 8
        %v372 = vadd.s32 %v370, 16
        %v373 = vadd.s32 %v370, 24
        %v374 = vadd.s32 %v370, 32
        %v375 = vadd.s32 %v370, 40
        %v376 = vadd.s32 %v370, 48
        %v377 = vadd.s32 %v370, 56
        %v378 = vadd.s32 %v370, 64
        %v379 = vadd.s32 %v370, 72
        %v380 = vadd.s32 %v370, 80
        %v381 = vadd.s32 %v370, 88
        %v382 = vadd.s32 %v370, 96
        %v383 = vadd.s32 %v370, 104
        %v384 = vadd.s32 %v370, 112
        %v385 = vadd.s32 %v370, 120
        %v386 = vstv %s368
        %v387 = vadd.s32 %v386, %v370
        %v388 = vadd.s32 %v386, %v371
        %v389 = vadd.s32 %v386, %v372
        %v390 = vadd.s32 %v386, %v373
        %v391 = vadd.s32 %v386, %v374
        %v392 = vadd.s32 %v386, %v375
        %v393 = vadd.s32 %v386, %v376
        %v394 = vadd.s32 %v386, %v377
        %v395 = vadd.s32 %v386, %v378
        %v396 = vadd.s32 %v386, %v379
        %v397 = vadd.s32 %v386, %v380
        %v398 = vadd.s32 %v386, %v381
        %v399 = vadd.s32 %v386, %v382
        %v400 = vadd.s32 %v386, %v383
        %v401 = vadd.s32 %v386, %v384
        %v402 = vadd.s32 %v386, %v385
        %v403 = vlaneseq
        %v404 = vshrl.u32 %v403, 7
        %v405 = vsub.s32 0, %v404
        %v406 = vrot.slane %v366, %v405
        %v407 = vlaneseq
        %v408 = vshrl.u32 %v407, 7
        %v409 = vsub.s32 1, %v408
        %v410 = vrot.slane %v366, %v409
        %vm411 = vcmp.eq.s32.totalorder %v387, %v406
        %vm412 = vcmp.eq.s32.totalorder %v387, %v410
        %vm413 = vcmp.eq.s32.totalorder %v388, %v406
        %vm414 = vcmp.eq.s32.totalorder %v388, %v410
        %vm415 = vcmp.eq.s32.totalorder %v389, %v406
        %vm416 = vcmp.eq.s32.totalorder %v389, %v410
        %vm417 = vcmp.eq.s32.totalorder %v390, %v406
        %vm418 = vcmp.eq.s32.totalorder %v390, %v410
        %vm419 = vcmp.eq.s32.totalorder %v391, %v406
        %vm420 = vcmp.eq.s32.totalorder %v391, %v410
        %vm421 = vcmp.eq.s32.totalorder %v392, %v406
        %vm422 = vcmp.eq.s32.totalorder %v392, %v410
        %vm423 = vcmp.eq.s32.totalorder %v393, %v406
        %vm424 = vcmp.eq.s32.totalorder %v393, %v410
        %vm425 = vcmp.eq.s32.totalorder %v394, %v406
        %vm426 = vcmp.eq.s32.totalorder %v394, %v410
        %vm427 = vcmp.eq.s32.totalorder %v395, %v406
        %vm428 = vcmp.eq.s32.totalorder %v395, %v410
        %vm429 = vcmp.eq.s32.totalorder %v396, %v406
        %vm430 = vcmp.eq.s32.totalorder %v396, %v410
        %vm431 = vcmp.eq.s32.totalorder %v397, %v406
        %vm432 = vcmp.eq.s32.totalorder %v397, %v410
        %vm433 = vcmp.eq.s32.totalorder %v398, %v406
        %vm434 = vcmp.eq.s32.totalorder %v398, %v410
        %vm435 = vcmp.eq.s32.totalorder %v399, %v406
        %vm436 = vcmp.eq.s32.totalorder %v399, %v410
        %vm437 = vcmp.eq.s32.totalorder %v400, %v406
        %vm438 = vcmp.eq.s32.totalorder %v400, %v410
        %vm439 = vcmp.eq.s32.totalorder %v401, %v406
        %vm440 = vcmp.eq.s32.totalorder %v401, %v410
        %vm441 = vcmp.eq.s32.totalorder %v402, %v406
        %vm442 = vcmp.eq.s32.totalorder %v402, %v410
        %v444 = vlaneseq
        %v445 = vshrl.u32 %v444, 7
        %v446 = vsub.s32 0, %v445
        %v447 = vrot.slane %v367, %v446
        %v448 = vlaneseq
        %v449 = vshrl.u32 %v448, 7
        %v450 = vsub.s32 1, %v449
        %v451 = vrot.slane %v367, %v450
        %v454 = vsel %vm411, %v447, 0.0
        %v455 = vsel %vm412, %v451, 0.0
        %v456 = vsel %vm413, %v447, 0.0
        %v457 = vsel %vm414, %v451, 0.0
        %v458 = vsel %vm415, %v447, 0.0
        %v459 = vsel %vm416, %v451, 0.0
        %v460 = vsel %vm417, %v447, 0.0
        %v461 = vsel %vm418, %v451, 0.0
        %v462 = vsel %vm419, %v447, 0.0
        %v463 = vsel %vm420, %v451, 0.0
        %v464 = vsel %vm421, %v447, 0.0
        %v465 = vsel %vm422, %v451, 0.0
        %v466 = vsel %vm423, %v447, 0.0
        %v467 = vsel %vm424, %v451, 0.0
        %v468 = vsel %vm425, %v447, 0.0
        %v469 = vsel %vm426, %v451, 0.0
        %v470 = vsel %vm427, %v447, 0.0
        %v471 = vsel %vm428, %v451, 0.0
        %v472 = vsel %vm429, %v447, 0.0
        %v473 = vsel %vm430, %v451, 0.0
        %v474 = vsel %vm431, %v447, 0.0
        %v475 = vsel %vm432, %v451, 0.0
        %v476 = vsel %vm433, %v447, 0.0
        %v477 = vsel %vm434, %v451, 0.0
        %v478 = vsel %vm435, %v447, 0.0
        %v479 = vsel %vm436, %v451, 0.0
        %v480 = vsel %vm437, %v447, 0.0
        %v481 = vsel %vm438, %v451, 0.0
        %v482 = vsel %vm439, %v447, 0.0
        %v483 = vsel %vm440, %v451, 0.0
        %v484 = vsel %vm441, %v447, 0.0
        %v485 = vsel %vm442, %v451, 0.0
        %v486 = vld [vmem:[%s340] sm:$0xff]
        %v487 = vld [vmem:[%s340 + $0x8] sm:$0xff]
        %v488 = vld [vmem:[%s340 + $0x10] sm:$0xff]
        %v489 = vld [vmem:[%s340 + $0x18] sm:$0xff]
        %v490 = vld [vmem:[%s340 + $0x20] sm:$0xff]
        %v491 = vld [vmem:[%s340 + $0x28] sm:$0xff]
        %v492 = vld [vmem:[%s340 + $0x30] sm:$0xff]
        %v493 = vld [vmem:[%s340 + $0x38] sm:$0xff]
        %v494 = vld [vmem:[%s340 + $0x40] sm:$0xff]
        %v495 = vld [vmem:[%s340 + $0x48] sm:$0xff]
        %v496 = vld [vmem:[%s340 + $0x50] sm:$0xff]
        %v497 = vld [vmem:[%s340 + $0x58] sm:$0xff]
        %v498 = vld [vmem:[%s340 + $0x60] sm:$0xff]
        %v499 = vld [vmem:[%s340 + $0x68] sm:$0xff]
        %v500 = vld [vmem:[%s340 + $0x70] sm:$0xff]
        %v501 = vld [vmem:[%s340 + $0x78] sm:$0xff]
        %v502 = vld [vmem:[%s292] sm:$0xff]
        %v503 = vld [vmem:[%s292 + $0x8] sm:$0xff]
        %v504 = vld [vmem:[%s292 + $0x10] sm:$0xff]
        %v505 = vld [vmem:[%s292 + $0x18] sm:$0xff]
        %v506 = vld [vmem:[%s292 + $0x20] sm:$0xff]
        %v507 = vld [vmem:[%s292 + $0x28] sm:$0xff]
        %v508 = vld [vmem:[%s292 + $0x30] sm:$0xff]
        %v509 = vld [vmem:[%s292 + $0x38] sm:$0xff]
        %v510 = vld [vmem:[%s292 + $0x40] sm:$0xff]
        %v511 = vld [vmem:[%s292 + $0x48] sm:$0xff]
        %v512 = vld [vmem:[%s292 + $0x50] sm:$0xff]
        %v513 = vld [vmem:[%s292 + $0x58] sm:$0xff]
        %v514 = vld [vmem:[%s292 + $0x60] sm:$0xff]
        %v515 = vld [vmem:[%s292 + $0x68] sm:$0xff]
        %v516 = vld [vmem:[%s292 + $0x70] sm:$0xff]
        %v517 = vld [vmem:[%s292 + $0x78] sm:$0xff]
        %v518 = vld [vmem:[%s292 + $0x80] sm:$0xff]
        %v519 = vld [vmem:[%s292 + $0x88] sm:$0xff]
        %v520 = vld [vmem:[%s292 + $0x90] sm:$0xff]
        %v521 = vld [vmem:[%s292 + $0x98] sm:$0xff]
        %v522 = vld [vmem:[%s292 + $0xa0] sm:$0xff]
        %v523 = vld [vmem:[%s292 + $0xa8] sm:$0xff]
        %v524 = vld [vmem:[%s292 + $0xb0] sm:$0xff]
        %v525 = vld [vmem:[%s292 + $0xb8] sm:$0xff]
        %v526 = vld [vmem:[%s292 + $0xc0] sm:$0xff]
        %v527 = vld [vmem:[%s292 + $0xc8] sm:$0xff]
        %v528 = vld [vmem:[%s292 + $0xd0] sm:$0xff]
        %v529 = vld [vmem:[%s292 + $0xd8] sm:$0xff]
        %v530 = vld [vmem:[%s292 + $0xe0] sm:$0xff]
        %v531 = vld [vmem:[%s292 + $0xe8] sm:$0xff]
        %v532 = vld [vmem:[%s292 + $0xf0] sm:$0xff]
        %v533 = vld [vmem:[%s292 + $0xf8] sm:$0xff]
        %534 = vmatprep.subr.mxu0 0.0
        %535 = vmatpush1.msra.mxu0 %v517
        %536 = vmatprep.subr.mxu0 0.0
        %537 = vmatpush1.msra.mxu0 %v516
        %538 = vmatprep.subr.mxu0 0.0
        %539 = vmatpush1.msra.mxu0 %v515
        %540 = vmatprep.subr.mxu0 0.0
        %541 = vmatpush1.msra.mxu0 %v514
        %542 = vmatprep.subr.mxu0 0.0
        %543 = vmatpush1.msra.mxu0 %v513
        %544 = vmatprep.subr.mxu0 0.0
        %545 = vmatpush1.msra.mxu0 %v512
        %546 = vmatprep.subr.mxu0 0.0
        %547 = vmatpush1.msra.mxu0 %v511
        %548 = vmatprep.subr.mxu0 0.0
        %549 = vmatpush1.msra.mxu0 %v510
        %550 = vmatprep.subr.mxu0 0.0
        %551 = vmatpush1.msra.mxu0 %v509
        %552 = vmatprep.subr.mxu0 0.0
        %553 = vmatpush1.msra.mxu0 %v508
        %554 = vmatprep.subr.mxu0 0.0
        %555 = vmatpush1.msra.mxu0 %v507
        %556 = vmatprep.subr.mxu0 0.0
        %557 = vmatpush1.msra.mxu0 %v506
        %558 = vmatprep.subr.mxu0 0.0
        %559 = vmatpush1.msra.mxu0 %v505
        %560 = vmatprep.subr.mxu0 0.0
        %561 = vmatpush1.msra.mxu0 %v504
        %562 = vmatprep.subr.mxu0 0.0
        %563 = vmatpush1.msra.mxu0 %v503
        %564 = vmatprep.subr.mxu0 0.0
        %565 = vmatpush1.msra.mxu0 %v502
        %566 = vmatprep.subr.mxu0 0.0
        %567 = vmatpush2.msra.mxu0 %v533
        %568 = vmatprep.subr.mxu0 0.0
        %569 = vmatpush2.msra.mxu0 %v532
        %570 = vmatprep.subr.mxu0 0.0
        %571 = vmatpush2.msra.mxu0 %v531
        %572 = vmatprep.subr.mxu0 0.0
        %573 = vmatpush2.msra.mxu0 %v530
        %574 = vmatprep.subr.mxu0 0.0
        %575 = vmatpush2.msra.mxu0 %v529
        %576 = vmatprep.subr.mxu0 0.0
        %577 = vmatpush2.msra.mxu0 %v528
        %578 = vmatprep.subr.mxu0 0.0
        %579 = vmatpush2.msra.mxu0 %v527
        %580 = vmatprep.subr.mxu0 0.0
        %581 = vmatpush2.msra.mxu0 %v526
        %582 = vmatprep.subr.mxu0 0.0
        %583 = vmatpush2.msra.mxu0 %v525
        %584 = vmatprep.subr.mxu0 0.0
        %585 = vmatpush2.msra.mxu0 %v524
        %586 = vmatprep.subr.mxu0 0.0
        %587 = vmatpush2.msra.mxu0 %v523
        %588 = vmatprep.subr.mxu0 0.0
        %589 = vmatpush2.msra.mxu0 %v522
        %590 = vmatprep.subr.mxu0 0.0
        %591 = vmatpush2.msra.mxu0 %v521
        %592 = vmatprep.subr.mxu0 0.0
        %593 = vmatpush2.msra.mxu0 %v520
        %594 = vmatprep.subr.mxu0 0.0
        %595 = vmatpush2.msra.mxu0 %v519
        %596 = vmatprep.subr.mxu0 0.0
        %597 = vmatpush2.msra.mxu0 %v518
        %598 = vmatprep.mubr.f32.mxu0 %v455
        %599 = vmatmul.mubr.f32.gmra.mxu0 %v454
        %v600 = vpop.f32.mrf.mxu0
        %v601 = vadd.f32 0.0, %v600
        %v602 = vpop.f32.mrf.mxu0
        %603 = vmatprep.mubr.f32.mxu0 %v457
        %604 = vmatmul.mubr.f32.gmra.mxu0 %v456
        %v605 = vpop.f32.mrf.mxu0
        %v606 = vadd.f32 0.0, %v605
        %v607 = vpop.f32.mrf.mxu0
        %608 = vmatprep.mubr.f32.mxu0 %v459
        %609 = vmatmul.mubr.f32.gmra.mxu0 %v458
        %v610 = vpop.f32.mrf.mxu0
        %v611 = vadd.f32 0.0, %v610
        %v612 = vpop.f32.mrf.mxu0
        %613 = vmatprep.mubr.f32.mxu0 %v461
        %614 = vmatmul.mubr.f32.gmra.mxu0 %v460
        %v615 = vpop.f32.mrf.mxu0
        %v616 = vadd.f32 0.0, %v615
        %v617 = vpop.f32.mrf.mxu0
        %618 = vmatprep.mubr.f32.mxu0 %v463
        %619 = vmatmul.mubr.f32.gmra.mxu0 %v462
        %v620 = vpop.f32.mrf.mxu0
        %v621 = vadd.f32 0.0, %v620
        %v622 = vpop.f32.mrf.mxu0
        %623 = vmatprep.mubr.f32.mxu0 %v465
        %624 = vmatmul.mubr.f32.gmra.mxu0 %v464
        %v625 = vpop.f32.mrf.mxu0
        %v626 = vadd.f32 0.0, %v625
        %v627 = vpop.f32.mrf.mxu0
        %628 = vmatprep.mubr.f32.mxu0 %v467
        %629 = vmatmul.mubr.f32.gmra.mxu0 %v466
        %v630 = vpop.f32.mrf.mxu0
        %v631 = vadd.f32 0.0, %v630
        %v632 = vpop.f32.mrf.mxu0
        %633 = vmatprep.mubr.f32.mxu0 %v469
        %634 = vmatmul.mubr.f32.gmra.mxu0 %v468
        %v635 = vpop.f32.mrf.mxu0
        %v636 = vadd.f32 0.0, %v635
        %v637 = vpop.f32.mrf.mxu0
        %638 = vmatprep.mubr.f32.mxu0 %v471
        %639 = vmatmul.mubr.f32.gmra.mxu0 %v470
        %v640 = vpop.f32.mrf.mxu0
        %v641 = vadd.f32 0.0, %v640
        %v642 = vpop.f32.mrf.mxu0
        %643 = vmatprep.mubr.f32.mxu0 %v473
        %644 = vmatmul.mubr.f32.gmra.mxu0 %v472
        %v645 = vpop.f32.mrf.mxu0
        %v646 = vadd.f32 0.0, %v645
        %v647 = vpop.f32.mrf.mxu0
        %648 = vmatprep.mubr.f32.mxu0 %v475
        %649 = vmatmul.mubr.f32.gmra.mxu0 %v474
        %v650 = vpop.f32.mrf.mxu0
        %v651 = vadd.f32 0.0, %v650
        %v652 = vpop.f32.mrf.mxu0
        %653 = vmatprep.mubr.f32.mxu0 %v477
        %654 = vmatmul.mubr.f32.gmra.mxu0 %v476
        %v655 = vpop.f32.mrf.mxu0
        %v656 = vadd.f32 0.0, %v655
        %v657 = vpop.f32.mrf.mxu0
        %658 = vmatprep.mubr.f32.mxu0 %v479
        %659 = vmatmul.mubr.f32.gmra.mxu0 %v478
        %v660 = vpop.f32.mrf.mxu0
        %v661 = vadd.f32 0.0, %v660
        %v662 = vpop.f32.mrf.mxu0
        %663 = vmatprep.mubr.f32.mxu0 %v481
        %664 = vmatmul.mubr.f32.gmra.mxu0 %v480
        %v665 = vpop.f32.mrf.mxu0
        %v666 = vadd.f32 0.0, %v665
        %v667 = vpop.f32.mrf.mxu0
        %668 = vmatprep.mubr.f32.mxu0 %v483
        %669 = vmatmul.mubr.f32.gmra.mxu0 %v482
        %v670 = vpop.f32.mrf.mxu0
        %v671 = vadd.f32 0.0, %v670
        %v672 = vpop.f32.mrf.mxu0
        %673 = vmatprep.mubr.f32.mxu0 %v485
        %674 = vmatmul.mubr.f32.gmra.mxu0 %v484
        %v675 = vpop.f32.mrf.mxu0
        %v676 = vadd.f32 0.0, %v675
        %v677 = vpop.f32.mrf.mxu0
        %678 = vdwg.mxu0
        %v679 = vadd.f32 %v486, %v601
        %v680 = vadd.f32 %v487, %v606
        %v681 = vadd.f32 %v488, %v611
        %v682 = vadd.f32 %v489, %v616
        %v683 = vadd.f32 %v490, %v621
        %v684 = vadd.f32 %v491, %v626
        %v685 = vadd.f32 %v492, %v631
        %v686 = vadd.f32 %v493, %v636
        %v687 = vadd.f32 %v494, %v641
        %v688 = vadd.f32 %v495, %v646
        %v689 = vadd.f32 %v496, %v651
        %v690 = vadd.f32 %v497, %v656
        %v691 = vadd.f32 %v498, %v661
        %v692 = vadd.f32 %v499, %v666
        %v693 = vadd.f32 %v500, %v671
        %v694 = vadd.f32 %v501, %v676
        %695 = vst [vmem:[%s340] sm:$0xff] %v679
        %696 = vst [vmem:[%s340 + $0x8] sm:$0xff] %v680
        %697 = vst [vmem:[%s340 + $0x10] sm:$0xff] %v681
        %698 = vst [vmem:[%s340 + $0x18] sm:$0xff] %v682
        %699 = vst [vmem:[%s340 + $0x20] sm:$0xff] %v683
        %700 = vst [vmem:[%s340 + $0x28] sm:$0xff] %v684
        %701 = vst [vmem:[%s340 + $0x30] sm:$0xff] %v685
        %702 = vst [vmem:[%s340 + $0x38] sm:$0xff] %v686
        %703 = vst [vmem:[%s340 + $0x40] sm:$0xff] %v687
        %704 = vst [vmem:[%s340 + $0x48] sm:$0xff] %v688
        %705 = vst [vmem:[%s340 + $0x50] sm:$0xff] %v689
        %706 = vst [vmem:[%s340 + $0x58] sm:$0xff] %v690
        %707 = vst [vmem:[%s340 + $0x60] sm:$0xff] %v691
        %708 = vst [vmem:[%s340 + $0x68] sm:$0xff] %v692
        %709 = vst [vmem:[%s340 + $0x70] sm:$0xff] %v693
        %710 = vst [vmem:[%s340 + $0x78] sm:$0xff] %v694
        %p711 = scmp.eq.s32.totalorder %s32, 1
        // Predicated region
        $region57: #{tpu_custom_call.1} parent=35 // pred_check
          %p712 = pneg %p711
        $region58: #{tpu_custom_call.1} parent=35 // pred_check_branch
          %714 = sbr.rel (%p712) target = $region60
        $region59: #{tpu_custom_call.1} parent=35 // pred_region
          %v715 = vld [vmem:[%s340] sm:$0xff]
          %v716 = vld [vmem:[%s340 + $0x8] sm:$0xff]
          %v717 = vld [vmem:[%s340 + $0x10] sm:$0xff]
          %v718 = vld [vmem:[%s340 + $0x18] sm:$0xff]
          %v719 = vld [vmem:[%s340 + $0x20] sm:$0xff]
          %v720 = vld [vmem:[%s340 + $0x28] sm:$0xff]
          %v721 = vld [vmem:[%s340 + $0x30] sm:$0xff]
          %v722 = vld [vmem:[%s340 + $0x38] sm:$0xff]
          %v723 = vld [vmem:[%s340 + $0x40] sm:$0xff]
          %v724 = vld [vmem:[%s340 + $0x48] sm:$0xff]
          %v725 = vld [vmem:[%s340 + $0x50] sm:$0xff]
          %v726 = vld [vmem:[%s340 + $0x58] sm:$0xff]
          %v727 = vld [vmem:[%s340 + $0x60] sm:$0xff]
          %v728 = vld [vmem:[%s340 + $0x68] sm:$0xff]
          %v729 = vld [vmem:[%s340 + $0x70] sm:$0xff]
          %v730 = vld [vmem:[%s340 + $0x78] sm:$0xff]
          %vm731 = vcmp.eq.f32.partialorder %v715, 0.0
          %vm732 = vcmp.eq.f32.partialorder %v716, 0.0
          %vm733 = vcmp.eq.f32.partialorder %v717, 0.0
          %vm734 = vcmp.eq.f32.partialorder %v718, 0.0
          %vm735 = vcmp.eq.f32.partialorder %v719, 0.0
          %vm736 = vcmp.eq.f32.partialorder %v720, 0.0
          %vm737 = vcmp.eq.f32.partialorder %v721, 0.0
          %vm738 = vcmp.eq.f32.partialorder %v722, 0.0
          %vm739 = vcmp.eq.f32.partialorder %v723, 0.0
          %vm740 = vcmp.eq.f32.partialorder %v724, 0.0
          %vm741 = vcmp.eq.f32.partialorder %v725, 0.0
          %vm742 = vcmp.eq.f32.partialorder %v726, 0.0
          %vm743 = vcmp.eq.f32.partialorder %v727, 0.0
          %vm744 = vcmp.eq.f32.partialorder %v728, 0.0
          %vm745 = vcmp.eq.f32.partialorder %v729, 0.0
          %vm746 = vcmp.eq.f32.partialorder %v730, 0.0
          %v747 = vsel %vm731, 1.0, %v715
          %v748 = vsel %vm732, 1.0, %v716
          %v749 = vsel %vm733, 1.0, %v717
          %v750 = vsel %vm734, 1.0, %v718
          %v751 = vsel %vm735, 1.0, %v719
          %v752 = vsel %vm736, 1.0, %v720
          %v753 = vsel %vm737, 1.0, %v721
          %v754 = vsel %vm738, 1.0, %v722
          %v755 = vsel %vm739, 1.0, %v723
          %v756 = vsel %vm740, 1.0, %v724
          %v757 = vsel %vm741, 1.0, %v725
          %v758 = vsel %vm742, 1.0, %v726
          %v759 = vsel %vm743, 1.0, %v727
          %v760 = vsel %vm744, 1.0, %v728
          %v761 = vsel %vm745, 1.0, %v729
          %v762 = vsel %vm746, 1.0, %v730
          %v763 = vrcp.pop %v747
          %v764 = vmul.f32 1.0, %v763
          %v765 = vrcp.pop %v748
          %v766 = vmul.f32 1.0, %v765
          %v767 = vrcp.pop %v749
          %v768 = vmul.f32 1.0, %v767
          %v769 = vrcp.pop %v750
          %v770 = vmul.f32 1.0, %v769
          %v771 = vrcp.pop %v751
          %v772 = vmul.f32 1.0, %v771
          %v773 = vrcp.pop %v752
          %v774 = vmul.f32 1.0, %v773
          %v775 = vrcp.pop %v753
          %v776 = vmul.f32 1.0, %v775
          %v777 = vrcp.pop %v754
          %v778 = vmul.f32 1.0, %v777
          %v779 = vrcp.pop %v755
          %v780 = vmul.f32 1.0, %v779
          %v781 = vrcp.pop %v756
          %v782 = vmul.f32 1.0, %v781
          %v783 = vrcp.pop %v757
          %v784 = vmul.f32 1.0, %v783
          %v785 = vrcp.pop %v758
          %v786 = vmul.f32 1.0, %v785
          %v787 = vrcp.pop %v759
          %v788 = vmul.f32 1.0, %v787
          %v789 = vrcp.pop %v760
          %v790 = vmul.f32 1.0, %v789
          %v791 = vrcp.pop %v761
          %v792 = vmul.f32 1.0, %v791
          %v793 = vrcp.pop %v762
          %v794 = vmul.f32 1.0, %v793
          %v795 = vld [vmem:[%s301] sm:$0xff]
          %v796 = vld [vmem:[%s301 + $0x8] sm:$0xff]
          %v797 = vld [vmem:[%s301 + $0x10] sm:$0xff]
          %v798 = vld [vmem:[%s301 + $0x18] sm:$0xff]
          %v799 = vld [vmem:[%s301 + $0x20] sm:$0xff]
          %v800 = vld [vmem:[%s301 + $0x28] sm:$0xff]
          %v801 = vld [vmem:[%s301 + $0x30] sm:$0xff]
          %v802 = vld [vmem:[%s301 + $0x38] sm:$0xff]
          %v803 = vld [vmem:[%s301 + $0x40] sm:$0xff]
          %v804 = vld [vmem:[%s301 + $0x48] sm:$0xff]
          %v805 = vld [vmem:[%s301 + $0x50] sm:$0xff]
          %v806 = vld [vmem:[%s301 + $0x58] sm:$0xff]
          %v807 = vld [vmem:[%s301 + $0x60] sm:$0xff]
          %v808 = vld [vmem:[%s301 + $0x68] sm:$0xff]
          %v809 = vld [vmem:[%s301 + $0x70] sm:$0xff]
          %v810 = vld [vmem:[%s301 + $0x78] sm:$0xff]
          %812 = vset.pattern.permute.xlu0 16
          %813 = vperm.xlu0 %812, %v764
          %v814 = vpop.permute.xlu0 %813
          %817 = vset.pattern.permute.xlu0 16
          %818 = vperm.xlu0 %817, %v766
          %v819 = vpop.permute.xlu0 %818
          %822 = vset.pattern.permute.xlu0 16
          %823 = vperm.xlu0 %822, %v768
          %v824 = vpop.permute.xlu0 %823
          %827 = vset.pattern.permute.xlu0 16
          %828 = vperm.xlu0 %827, %v770
          %v829 = vpop.permute.xlu0 %828
          %832 = vset.pattern.permute.xlu0 16
          %833 = vperm.xlu0 %832, %v772
          %v834 = vpop.permute.xlu0 %833
          %837 = vset.pattern.permute.xlu0 16
          %838 = vperm.xlu0 %837, %v774
          %v839 = vpop.permute.xlu0 %838
          %842 = vset.pattern.permute.xlu0 16
          %843 = vperm.xlu0 %842, %v776
          %v844 = vpop.permute.xlu0 %843
          %847 = vset.pattern.permute.xlu0 16
          %848 = vperm.xlu0 %847, %v778
          %v849 = vpop.permute.xlu0 %848
          %852 = vset.pattern.permute.xlu0 16
          %853 = vperm.xlu0 %852, %v780
          %v854 = vpop.permute.xlu0 %853
          %857 = vset.pattern.permute.xlu0 16
          %858 = vperm.xlu0 %857, %v782
          %v859 = vpop.permute.xlu0 %858
          %862 = vset.pattern.permute.xlu0 16
          %863 = vperm.xlu0 %862, %v784
          %v864 = vpop.permute.xlu0 %863
          %867 = vset.pattern.permute.xlu0 16
          %868 = vperm.xlu0 %867, %v786
          %v869 = vpop.permute.xlu0 %868
          %872 = vset.pattern.permute.xlu0 16
          %873 = vperm.xlu0 %872, %v788
          %v874 = vpop.permute.xlu0 %873
          %877 = vset.pattern.permute.xlu0 16
          %878 = vperm.xlu0 %877, %v790
          %v879 = vpop.permute.xlu0 %878
          %882 = vset.pattern.permute.xlu0 16
          %883 = vperm.xlu0 %882, %v792
          %v884 = vpop.permute.xlu0 %883
          %887 = vset.pattern.permute.xlu0 16
          %888 = vperm.xlu0 %887, %v794
          %v889 = vpop.permute.xlu0 %888
          %v891 = vmul.f32 %v715, %v814
          %v892 = vmul.f32 %v716, %v819
          %v893 = vmul.f32 %v717, %v824
          %v894 = vmul.f32 %v718, %v829
          %v895 = vmul.f32 %v719, %v834
          %v896 = vmul.f32 %v720, %v839
          %v897 = vmul.f32 %v721, %v844
          %v898 = vmul.f32 %v722, %v849
          %v899 = vmul.f32 %v723, %v854
          %v900 = vmul.f32 %v724, %v859
          %v901 = vmul.f32 %v725, %v864
          %v902 = vmul.f32 %v726, %v869
          %v903 = vmul.f32 %v727, %v874
          %v904 = vmul.f32 %v728, %v879
          %v905 = vmul.f32 %v729, %v884
          %v906 = vmul.f32 %v730, %v889
          %v907 = vadd.f32 %v795, %v891
          %v908 = vadd.f32 %v796, %v892
          %v909 = vadd.f32 %v797, %v893
          %v910 = vadd.f32 %v798, %v894
          %v911 = vadd.f32 %v799, %v895
          %v912 = vadd.f32 %v800, %v896
          %v913 = vadd.f32 %v801, %v897
          %v914 = vadd.f32 %v802, %v898
          %v915 = vadd.f32 %v803, %v899
          %v916 = vadd.f32 %v804, %v900
          %v917 = vadd.f32 %v805, %v901
          %v918 = vadd.f32 %v806, %v902
          %v919 = vadd.f32 %v807, %v903
          %v920 = vadd.f32 %v808, %v904
          %v921 = vadd.f32 %v809, %v905
          %v922 = vadd.f32 %v810, %v906
          %v923 = vmax.f32 %v907, 0.0
          %v924 = vmax.f32 %v908, 0.0
          %v925 = vmax.f32 %v909, 0.0
          %v926 = vmax.f32 %v910, 0.0
          %v927 = vmax.f32 %v911, 0.0
          %v928 = vmax.f32 %v912, 0.0
          %v929 = vmax.f32 %v913, 0.0
          %v930 = vmax.f32 %v914, 0.0
          %v931 = vmax.f32 %v915, 0.0
          %v932 = vmax.f32 %v916, 0.0
          %v933 = vmax.f32 %v917, 0.0
          %v934 = vmax.f32 %v918, 0.0
          %v935 = vmax.f32 %v919, 0.0
          %v936 = vmax.f32 %v920, 0.0
          %v937 = vmax.f32 %v921, 0.0
          %v938 = vmax.f32 %v922, 0.0
          %939 = vst [vmem:[%s340] sm:$0xff] %v923
          %940 = vst [vmem:[%s340 + $0x8] sm:$0xff] %v924
          %941 = vst [vmem:[%s340 + $0x10] sm:$0xff] %v925
          %942 = vst [vmem:[%s340 + $0x18] sm:$0xff] %v926
          %943 = vst [vmem:[%s340 + $0x20] sm:$0xff] %v927
          %944 = vst [vmem:[%s340 + $0x28] sm:$0xff] %v928
          %945 = vst [vmem:[%s340 + $0x30] sm:$0xff] %v929
          %946 = vst [vmem:[%s340 + $0x38] sm:$0xff] %v930
          %947 = vst [vmem:[%s340 + $0x40] sm:$0xff] %v931
          %948 = vst [vmem:[%s340 + $0x48] sm:$0xff] %v932
          %949 = vst [vmem:[%s340 + $0x50] sm:$0xff] %v933
          %950 = vst [vmem:[%s340 + $0x58] sm:$0xff] %v934
          %951 = vst [vmem:[%s340 + $0x60] sm:$0xff] %v935
          %952 = vst [vmem:[%s340 + $0x68] sm:$0xff] %v936
          %953 = vst [vmem:[%s340 + $0x70] sm:$0xff] %v937
          %954 = vst [vmem:[%s340 + $0x78] sm:$0xff] %v938
        $region60: #{tpu_custom_call.1} parent=35 // pred_fallthru
          _
        %s955 = sand.u32 %s151, 1
        %s956 = scalar_lea.sflag [#allocation4], %s955
        %s957 = sand.u32 %s151, 1
        %s958 = smul.addr %s957, 128
        %s959 = scalar_lea.vmem [#allocation10], %s958
        // Predicated region
        $region61: #{tpu_custom_call.1} parent=35 // pred_check
          %p960 = pneg %p161
        $region62: #{tpu_custom_call.1} parent=35 // pred_check_branch
          %962 = sbr.rel (%p960) target = $region64
        $region63: #{tpu_custom_call.1} parent=35 // pred_region
          %s963 = smul.u32 16, %s31
          %s965 = ssub.s32 2048, 2048
          %966 = vsyncadd %s956, %s965
          %s967 = smul.addr %s963, 128
          %s968 = scalar_lea.hbm %s4, %s967
          %s969 = sshll.u32 %s959, 4
          %s970 = int_to_ptr.vmem [resolvable:$true] %s969
          %975 = dma.vmem_to_hbm [thread:$0]  %s970, 2048, %s968, %s956, 128, 128, 8
        $region64: #{tpu_custom_call.1} parent=35 // pred_fallthru
          _
      $region36: #{tpu_custom_call.1} parent=5 // pred_fallthru
        _
      %p976 = scmp.le.s32.totalorder 2, %s22
      // Predicated region
      $region65: #{tpu_custom_call.1} parent=5 // pred_check
        %p977 = pneg %p976
      $region66: #{tpu_custom_call.1} parent=5 // pred_check_branch
        %979 = sbr.rel (%p977) target = $region68
      $region67: #{tpu_custom_call.1} parent=5 // pred_region
        %s980 = ssub.s32 %s22, 2
        // Predicated region
        $region69: #{tpu_custom_call.1} parent=67 // pred_check
          %p981 = pneg %p167
        $region70: #{tpu_custom_call.1} parent=67 // pred_check_branch
          %983 = sbr.rel (%p981) target = $region72
        $region71: #{tpu_custom_call.1} parent=67 // pred_region
          %s984 = sand.u32 %s152, 1
          %s985 = scalar_lea.sflag [#allocation4], %s984
          %s986 = sand.u32 %s152, 1
          %s987 = smul.addr %s986, 128
          %s988 = scalar_lea.vmem [#allocation10], %s987
          %989 = dma.done %s985, 2048
        $region72: #{tpu_custom_call.1} parent=67 // pred_fallthru
          _
      $region68: #{tpu_custom_call.1} parent=5 // pred_fallthru
        _
    $region6: #{tpu_custom_call.1} parent=1 // loop_footer
      %s26 = sadd.s32 1, %s22
    $region7: #{tpu_custom_call.1} parent=1 // loop_footer_branch
      %21 = sbr.rel target = $region3
    $region8: #{tpu_custom_call.1} parent=1 // loop_exit
      _
    %990 = vsyncpa [#allocation3], 1
    %s991 = scalar_lea.sflag [#allocation3], 1
    %992 = vsyncpa %s991, 1
    %993 = vsyncpa [#allocation6], 1
    %s994 = scalar_lea.sflag [#allocation6], 1
    %995 = vsyncpa %s994, 1
    %996 = vsyncpa [#allocation9], 1
    %s997 = scalar_lea.sflag [#allocation9], 1
    %998 = vsyncpa %s997, 1
    %999 = vsyncpa [#allocation4], 1
    %s1000 = scalar_lea.sflag [#allocation4], 1
    %1001 = vsyncpa %s1000, 1

</llo_original>
